<compile_context>
chip_gen: v7x
topology: tpu7x:2x2x1
jax: 0.10.0
libtpu: 0.0.40
codegen_flags: <defaults>
</compile_context>

<pallas_src>
import functools

import numpy as np

import jax
import jax.numpy as jnp
from jax import lax
from jax.experimental import pallas as pl
from jax.experimental.pallas import tpu as pltpu


# --------------------------------------------------------------------------- kernel


def attention_kernel(enc_ref, hid_ref, wa_t_ref, ua_t_ref, va_ref, out_ref,
                     *, mm_dtype, ew_dtype, valid_len):
    """One grid step handles `b_blk` batches.

    enc_ref : (b_blk, L_pad, H)  original input dtype (cast to mm_dtype in-kernel)
    hid_ref : (b_blk, H)         original input dtype
    wa_t_ref, ua_t_ref : (H, H)  mm_dtype, PRE-TRANSPOSED to (in, out) layout
    va_ref  : (1, H)             float32
    out_ref : (b_blk, L_pad)     float32, lane-dense (L_pad % 128 == 0)
    """
    b_blk, l_pad, hidden = enc_ref.shape

    # Cast fused into the kernel; with L_pad % 8 == 0 both reshapes below are layout views,
    # so the Wa projection is ONE big (b_blk*L_pad, H) @ (H, H) MXU matmul.
    enc2d = enc_ref[...].reshape(b_blk * l_pad, hidden).astype(mm_dtype)
    hid = hid_ref[...].astype(mm_dtype)

    wa_proj = jnp.dot(enc2d, wa_t_ref[...], preferred_element_type=jnp.float32)
    ua_proj = jnp.dot(hid, ua_t_ref[...], preferred_element_type=jnp.float32)

    proj = wa_proj.reshape(b_blk, l_pad, hidden) + ua_proj[:, None, :]

    # tanh + *Va on EUP/VPU.  ew_dtype = bf16 on v6e/v7x (bf16-native), f32 otherwise.
    e = jnp.tanh(proj.astype(ew_dtype))                               # (b_blk, L_pad, H)
    va = va_ref[...].astype(ew_dtype).reshape(1, 1, hidden)
    scores = jnp.sum((e * va).astype(jnp.float32), axis=-1)           # f32 lane reduce

    # Mask padded sequence positions (only emitted when L was actually padded).
    if valid_len < l_pad:
        col = lax.broadcasted_iota(jnp.int32, scores.shape, 1)
        scores = jnp.where(col < valid_len, scores, jnp.float32(-1e30))

    # f32 softmax over the sequence (lane) axis; divide moved to the EUP reciprocal.
    m = jnp.max(scores, axis=-1, keepdims=True)
    ex = jnp.exp(scores - m)
    denom = jnp.sum(ex, axis=-1, keepdims=True)
    out_ref[...] = (ex * pl.reciprocal(denom, approx=False)).astype(out_ref.dtype)


# --------------------------------------------------------------------------- tiling / sizing


def _round_up(n, m):
    return ((n + m - 1) // m) * m


def _device_kind():
    try:
        return jax.devices()[0].device_kind.lower()
    except Exception:
        return ""


def _vmem_capacity_bytes():
    """Physical per-TensorCore VMEM (64 MiB on v7x, 128 MiB on v5e/v6e); safe fallback."""
    try:
        info = pltpu.get_tpu_info()
        cap = int(getattr(info, "vmem_capacity_bytes", 0))
        if cap > 0:
            return cap
    except Exception:
        pass
    return 64 << 20  # conservative: assume the smallest (v7x) VMEM


def _weight_bytes(hidden, mm_bytes):
    # Wa^T, Ua^T (mm_dtype) and Va (f32); default pipeline allocates 2 buffers each
    # (constant index_map -> DMA'd once, but both buffers are still reserved).
    return 2 * (2 * hidden * hidden * mm_bytes + hidden * 4)


def _per_step_bytes(b_blk, l_pad, hidden, mm_bytes, enc_bytes, ew_bytes):
    # double-buffered encoder block + in-kernel cast copy + f32/ew intermediates.
    per_elem = 2 * enc_bytes + mm_bytes + 8 + 2 * ew_bytes
    big = b_blk * l_pad * hidden * per_elem
    small = b_blk * hidden * (2 * enc_bytes + mm_bytes + 4) + b_blk * l_pad * (2 * 4 + 8)
    return big + small


def _choose_batch_tiling(batch, l_pad, hidden, mm_bytes, enc_bytes, ew_bytes, vmem_cap):
    """Pick (padded_batch, batch_block).

    batch_block must divide padded_batch and be either the full (padded) batch or a multiple
    of 8 (sublane legality of the 2-D hidden/output blocks).  Preference order:
      1) per-step working set fits the generation-aware VMEM budget,
      2) >= 2 grid steps (lets "parallel" shard across TensorCores on v7x / megacore chips;
         costs only ~0.35us of per-step overhead on single-TC chips),
      3) no batch padding,
      4) the largest fitting block (fewest steps, best DMA efficiency); smallest if none fits.
    """
    budget = vmem_cap - _weight_bytes(hidden, mm_bytes)

    pad_options = [batch]
    if batch % 8 != 0:
        pad_options.append(_round_up(batch, 8))

    best_key, best = None, (batch, batch)
    for b_pad in pad_options:
        for d in range(1, b_pad + 1):
            if b_pad % d != 0 or not (d == b_pad or d % 8 == 0):
                continue
            steps = b_pad // d
            fits = _per_step_bytes(d, l_pad, hidden, mm_bytes, enc_bytes, ew_bytes) <= budget
            key = (fits, steps >= 2, -(b_pad - batch), d if fits else -d)
            if best_key is None or key > best_key:
                best_key, best = key, (b_pad, d)
    return best


def _vmem_limit_bytes(b_blk, l_pad, hidden, mm_bytes, enc_bytes, ew_bytes, vmem_cap):
    need = (_per_step_bytes(b_blk, l_pad, hidden, mm_bytes, enc_bytes, ew_bytes)
            + _weight_bytes(hidden, mm_bytes))
    return int(min(max(int(need * 1.25), 8 << 20), vmem_cap))


# --------------------------------------------------------------------------- wrapper


def attention_forward(encoder_outputs, last_hiddens, wa_weight, ua_weight, va_weight,
                      *, matmul_dtype=jnp.bfloat16):
    """
    encoder_outputs: (B, L, H); last_hiddens: (1, B, H)
    wa_weight, ua_weight: (H, H); va_weight: (1, H)   [PyTorch (out, in) Linear layout]
    Returns ai: (B, L) float32 softmax attention weights (rows sum to 1).
    """
    B, L, H = encoder_outputs.shape
    mm_dtype = jnp.dtype(matmul_dtype)
    mm_bytes = mm_dtype.itemsize
    enc_bytes = jnp.dtype(encoder_outputs.dtype).itemsize

    # Elementwise dtype: bf16 only when the matmul path is bf16 AND the chip has a
    # bf16-native VPU/EUP (v6e/v7x); f32 on v5e and older, and on the f32 matmul path.
    kind = _device_kind()
    legacy = any(tag in kind for tag in ("v2", "v3", "v4", "v5"))
    ew_dtype = mm_dtype if (mm_dtype == jnp.dtype(jnp.bfloat16) and not legacy) else jnp.dtype(jnp.float32)
    ew_bytes = ew_dtype.itemsize

    # Generation-aware VMEM budget: ~80% of physical per-TC VMEM leaves runtime headroom
    # (~51 MiB on v7x, ~102 MiB on v5e/v6e).
    vmem_cap = int(_vmem_capacity_bytes() * 0.8)

    # Lane-dense output + view-only reshapes: pad L to a multiple of 128.
    L_pad = _round_up(L, 128)
    B_pad, b_blk = _choose_batch_tiling(B, L_pad, H, mm_bytes, enc_bytes, ew_bytes, vmem_cap)

    enc = encoder_outputs
    if L_pad != L or B_pad != B:
        enc = jnp.pad(enc, ((0, B_pad - B), (0, L_pad - L), (0, 0)))
    hid = last_hiddens[0]                                  # (B, H): same rows as transpose(0, 1)
    if B_pad != B:
        hid = jnp.pad(hid, ((0, B_pad - B), (0, 0)))

    # One-time weight prep: pre-transpose to (in, out) so the kernel is a plain (M,K)@(K,N)
    # matmul (no per-step XLU transpose of the RHS); cast to the MXU dtype.
    wa_t = wa_weight.T.astype(mm_dtype)
    ua_t = ua_weight.T.astype(mm_dtype)
    va = va_weight.astype(jnp.float32)

    grid = (B_pad // b_blk,)
    kernel = functools.partial(attention_kernel, mm_dtype=mm_dtype, ew_dtype=ew_dtype,
                               valid_len=L)

    cost = pl.CostEstimate(
        flops=int(2 * B_pad * L_pad * H * H + 2 * B_pad * H * H + 2 * B_pad * L_pad * H),
        transcendentals=int(B_pad * L_pad * H + B_pad * L_pad),
        bytes_accessed=int(enc.size * enc_bytes + hid.size * enc_bytes
                           + 2 * H * H * mm_bytes + H * 4 + B_pad * L_pad * 4))

    out = pl.pallas_call(
        kernel,
        out_shape=jax.ShapeDtypeStruct((B_pad, L_pad), jnp.float32),
        grid=grid,
        in_specs=[
            pl.BlockSpec((b_blk, L_pad, H), lambda b: (b, 0, 0)),   # encoder block (b_blk batches)
            pl.BlockSpec((b_blk, H), lambda b: (b, 0)),             # decoder-hidden block
            pl.BlockSpec((H, H), lambda b: (0, 0)),                 # Wa^T (resident)
            pl.BlockSpec((H, H), lambda b: (0, 0)),                 # Ua^T (resident)
            pl.BlockSpec((1, H), lambda b: (0, 0)),                 # Va (resident, f32)
        ],
        out_specs=pl.BlockSpec((b_blk, L_pad), lambda b: (b, 0)),   # lane-dense output block
        compiler_params=pltpu.CompilerParams(
            dimension_semantics=("parallel",),
            vmem_limit_bytes=_vmem_limit_bytes(b_blk, L_pad, H, mm_bytes,
                                               enc_bytes, ew_bytes, vmem_cap)),
        cost_estimate=cost,
    )(enc, hid, wa_t, ua_t, va)

    if B_pad != B or L_pad != L:
        out = out[:B, :L]
    return out                                             # (B, L) float32


def attention_reference(encoder_outputs, last_hiddens, wa_weight, ua_weight, va_weight):
    """Pure-JAX (f32) reference mirroring the PyTorch forward."""
    last_hidden = jnp.transpose(last_hiddens, (1, 0, 2))                 # (B, 1, H)
    wa = encoder_outputs @ wa_weight.T                                   # (B, L, H)
    ua = last_hidden @ ua_weight.T                                       # (B, 1, H)
    energy = (jnp.tanh(wa + ua) @ va_weight.T)[..., 0]                   # (B, L)
    return jax.nn.softmax(energy, axis=-1)


if __name__ == "__main__":
    B, L, H = 2, 8, 32
    key = jax.random.PRNGKey(0)
    k_enc, k_hid, k_wa, k_ua, k_va = jax.random.split(key, 5)

    encoder_outputs = jax.random.normal(k_enc, (B, L, H), dtype=jnp.float32)
    last_hiddens = jax.random.normal(k_hid, (1, B, H), dtype=jnp.float32)

    # Deterministic "Linear" weights (PyTorch (out_features, in_features) convention), no bias.
    bound = 1.0 / jnp.sqrt(H)
    wa_weight = jax.random.uniform(k_wa, (H, H), jnp.float32, -bound, bound)
    ua_weight = jax.random.uniform(k_ua, (H, H), jnp.float32, -bound, bound)
    va_weight = jax.random.uniform(k_va, (1, H), jnp.float32, -bound, bound)

    ref = attention_reference(encoder_outputs, last_hiddens, wa_weight, ua_weight, va_weight)

    # f32 matmul path (elementwise stays f32 too): tight match against the XLA reference.
    ai_f32 = attention_forward(encoder_outputs, last_hiddens, wa_weight, ua_weight,
                               va_weight, matmul_dtype=jnp.float32)
    ai_f32 = jax.block_until_ready(ai_f32)
    assert ai_f32.shape == (B, L), ai_f32.shape
    assert jnp.allclose(ai_f32, ref, rtol=1e-5, atol=1e-5), "f32 kernel mismatch vs reference"
    assert jnp.allclose(jnp.sum(ai_f32, axis=-1), 1.0, atol=1e-5), "softmax rows must sum to 1"

    # bf16 matmul path (default, MXU-native; bf16 tanh on bf16-native chips): looser tolerance.
    ai_bf16 = attention_forward(encoder_outputs, last_hiddens, wa_weight, ua_weight, va_weight)
    ai_bf16 = jax.block_until_ready(ai_bf16)
    assert ai_bf16.shape == (B, L), ai_bf16.shape
    assert jnp.allclose(ai_bf16, ref, atol=2e-2), "bf16 kernel drifted too far from reference"
    assert jnp.allclose(jnp.sum(ai_bf16, axis=-1), 1.0, atol=1e-5), "softmax rows must sum to 1"

    print("KERNEL_OK")
</pallas_src>

<mosaic_0001>
module attributes {stable_mosaic.version = 11 : i64} {
  func.func @attention_kernel(%arg0: i32, %arg1: memref<2x128x32xf32, #tpu.memory_space<vmem>>, %arg2: memref<2x32xf32, #tpu.memory_space<vmem>>, %arg3: memref<32x32xf32, #tpu.memory_space<vmem>>, %arg4: memref<32x32xf32, #tpu.memory_space<vmem>>, %arg5: memref<1x32xf32, #tpu.memory_space<vmem>>, %arg6: memref<2x128xf32, #tpu.memory_space<vmem>>) attributes {dimension_semantics = [#tpu.dimension_semantics<parallel>], iteration_bounds = array<i64: 1>, scalar_prefetch = 0 : i64, scratch_operands = 0 : i64, tpu.core_type = #tpu.core_type<tc>, window_params = [{transform_indices = @transform_0, window_bounds = array<i64: 2, 128, 32>}, {transform_indices = @transform_1, window_bounds = array<i64: 2, 32>}, {pipeline_mode = #tpu.pipeline_mode<synchronous>, transform_indices = @transform_2, window_bounds = array<i64: 32, 32>}, {pipeline_mode = #tpu.pipeline_mode<synchronous>, transform_indices = @transform_3, window_bounds = array<i64: 32, 32>}, {pipeline_mode = #tpu.pipeline_mode<synchronous>, transform_indices = @transform_4, window_bounds = array<i64: 1, 32>}, {transform_indices = @transform_5, window_bounds = array<i64: 2, 128>}]} {
    %c0 = arith.constant 0 : index
    %c0_0 = arith.constant 0 : index
    %c0_1 = arith.constant 0 : index
    %0 = vector.load %arg1[%c0, %c0_0, %c0_1] : memref<2x128x32xf32, #tpu.memory_space<vmem>>, vector<2x128x32xf32>
    %1 = vector.shape_cast %0 : vector<2x128x32xf32> to vector<256x32xf32>
    %c0_2 = arith.constant 0 : index
    %c0_3 = arith.constant 0 : index
    %2 = vector.load %arg2[%c0_2, %c0_3] : memref<2x32xf32, #tpu.memory_space<vmem>>, vector<2x32xf32>
    %c0_4 = arith.constant 0 : index
    %c0_5 = arith.constant 0 : index
    %3 = vector.load %arg3[%c0_4, %c0_5] : memref<32x32xf32, #tpu.memory_space<vmem>>, vector<32x32xf32>
    %cst = arith.constant dense<0.000000e+00> : vector<256x32xf32>
    %4 = tpu.matmul %1, %3, %cst {dimension_numbers = #tpu.dot_dimension_numbers<[1], [0], [0], [1], [0, 0, 1, 1], [], []>} : vector<256x32xf32>, vector<32x32xf32>, vector<256x32xf32> -> vector<256x32xf32>
    %c0_6 = arith.constant 0 : index
    %c0_7 = arith.constant 0 : index
    %5 = vector.load %arg4[%c0_6, %c0_7] : memref<32x32xf32, #tpu.memory_space<vmem>>, vector<32x32xf32>
    %cst_8 = arith.constant dense<0.000000e+00> : vector<2x32xf32>
    %6 = tpu.matmul %2, %5, %cst_8 {dimension_numbers = #tpu.dot_dimension_numbers<[1], [0], [0], [1], [0, 0, 1, 1], [], []>} : vector<2x32xf32>, vector<32x32xf32>, vector<2x32xf32> -> vector<2x32xf32>
    %7 = vector.shape_cast %4 : vector<256x32xf32> to vector<2x128x32xf32>
    %8 = vector.shape_cast %6 : vector<2x32xf32> to vector<2x1x32xf32>
    %9 = vector.broadcast %8 : vector<2x1x32xf32> to vector<2x128x32xf32>
    %10 = arith.addf %7, %9 : vector<2x128x32xf32>
    %11 = math.tanh %10 : vector<2x128x32xf32>
    %c0_9 = arith.constant 0 : index
    %c0_10 = arith.constant 0 : index
    %12 = vector.load %arg5[%c0_9, %c0_10] : memref<1x32xf32, #tpu.memory_space<vmem>>, vector<1x32xf32>
    %13 = vector.shape_cast %12 : vector<1x32xf32> to vector<1x1x32xf32>
    %14 = vector.broadcast %13 : vector<1x1x32xf32> to vector<2x128x32xf32>
    %15 = arith.mulf %11, %14 : vector<2x128x32xf32>
    %cst_11 = arith.constant dense<0.000000e+00> : vector<2x128xf32>
    %16 = vector.multi_reduction <add>, %15, %cst_11 [2] : vector<2x128x32xf32> to vector<2x128xf32>
    %17 = tpu.iota {dimensions = array<i32: 1>} : vector<2x128xi32>
    %c8_i32 = arith.constant 8 : i32
    %18 = vector.broadcast %c8_i32 : i32 to vector<2x128xi32>
    %19 = arith.cmpi slt, %17, %18 : vector<2x128xi32>
    %cst_12 = arith.constant -1.000000e+30 : f32
    %20 = vector.broadcast %cst_12 : f32 to vector<2x128xf32>
    %21 = arith.select %19, %16, %20 : vector<2x128xi1>, vector<2x128xf32>
    %cst_13 = arith.constant dense<0xFF800000> : vector<2xf32>
    %22 = vector.multi_reduction <maximumf>, %21, %cst_13 [1] : vector<2x128xf32> to vector<2xf32>
    %23 = vector.shape_cast %22 : vector<2xf32> to vector<2x1xf32>
    %24 = vector.broadcast %23 : vector<2x1xf32> to vector<2x128xf32>
    %25 = arith.subf %21, %24 : vector<2x128xf32>
    %26 = math.exp %25 : vector<2x128xf32>
    %cst_14 = arith.constant dense<0.000000e+00> : vector<2xf32>
    %27 = vector.multi_reduction <add>, %26, %cst_14 [1] : vector<2x128xf32> to vector<2xf32>
    %28 = vector.shape_cast %27 : vector<2xf32> to vector<2x1xf32>
    %29 = tpu.reciprocal %28 : vector<2x1xf32> -> vector<2x1xf32>
    %30 = vector.broadcast %29 : vector<2x1xf32> to vector<2x128xf32>
    %31 = arith.mulf %26, %30 : vector<2x128xf32>
    %c0_15 = arith.constant 0 : index
    %c0_16 = arith.constant 0 : index
    %32 = vector.load %arg6[%c0_15, %c0_16] : memref<2x128xf32, #tpu.memory_space<vmem>>, vector<2x128xf32>
    tpu.vector_store %arg6[%c0_15, %c0_16], %31 {strides = array<i32>} : memref<2x128xf32, #tpu.memory_space<vmem>>, vector<2x128xf32>,
    return
  }
  func.func @transform_0(%arg0: i32) -> (i32, i32, i32) {
    %c0_i32 = arith.constant 0 : i32
    %c0_i32_0 = arith.constant 0 : i32
    %c0_i32_1 = arith.constant 0 : i32
    return %arg0, %c0_i32, %c0_i32_0 : i32, i32, i32
  }
  func.func @transform_1(%arg0: i32) -> (i32, i32) {
    %c0_i32 = arith.constant 0 : i32
    %c0_i32_0 = arith.constant 0 : i32
    return %arg0, %c0_i32 : i32, i32
  }
  func.func @transform_2(%arg0: i32) -> (i32, i32) {
    %c0_i32 = arith.constant 0 : i32
    %c0_i32_0 = arith.constant 0 : i32
    %c0_i32_1 = arith.constant 0 : i32
    return %c0_i32, %c0_i32_0 : i32, i32
  }
  func.func @transform_3(%arg0: i32) -> (i32, i32) {
    %c0_i32 = arith.constant 0 : i32
    %c0_i32_0 = arith.constant 0 : i32
    %c0_i32_1 = arith.constant 0 : i32
    return %c0_i32, %c0_i32_0 : i32, i32
  }
  func.func @transform_4(%arg0: i32) -> (i32, i32) {
    %c0_i32 = arith.constant 0 : i32
    %c0_i32_0 = arith.constant 0 : i32
    %c0_i32_1 = arith.constant 0 : i32
    return %c0_i32, %c0_i32_0 : i32, i32
  }
  func.func @transform_5(%arg0: i32) -> (i32, i32) {
    %c0_i32 = arith.constant 0 : i32
    %c0_i32_0 = arith.constant 0 : i32
    return %arg0, %c0_i32 : i32, i32
  }
}

</mosaic_0001>

<llo_original>
// kernel: tpu_custom_call.1
$region0: #{tpu_custom_call.1}
  #allocation0 [shape = 'u32[]', space=smem, size = 0x4, offset = 0x4, fixed_abs, tag = 'smem constant byte address 0x4 - core index']
  #allocation1 [shape = 'u32[144,128]{1,0:T(1,128)}', space=vmem, size = 0x12000, scoped, tag = 'internal scratch']
  %s0 = inlined_call_operand.vmem [shape: f32[2,128,32], index: 0, kind: input, shape index: {}]
  %s1 = inlined_call_operand.vmem [shape: f32[2,32], index: 1, kind: input, shape index: {}]
  %s2 = inlined_call_operand.vmem [shape: f32[32,32], index: 2, kind: input, shape index: {}]
  %s3 = inlined_call_operand.vmem [shape: f32[32,32], index: 3, kind: input, shape index: {}]
  %s4 = inlined_call_operand.vmem [shape: f32[1,32], index: 4, kind: input, shape index: {}]
  %s5 = inlined_call_operand.hbm [shape: f32[2,128], index: 5, kind: output, shape index: {}]
  %s6 = sld [smem:[#allocation0]]
  $region30: #{tpu_custom_call.1} parent=0
    _
  %s8 = ssub.s32 1, %s6
  %s9 = scalar_select 0, %s8, %s6
  $region1: #{tpu_custom_call.1} parent=0
    #allocation2 [shape = 'u8[1024]{0}', space=vmem, size = 0x400, scoped, tag = 'output window, operand 0, single buffered']
    #allocation3 [shape = 's32[1]{0}', space=sflag, size = 0x4, scoped, tag = 'scoped memory for tpu_custom_call.1']
    %10 = vsyncpa [#allocation3], 0
    // Predicated region
    $region2: #{tpu_custom_call.1} parent=1 // pred_check
      _
    $region3: #{tpu_custom_call.1} parent=1 // pred_check_branch
      %12 = sbr.rel (0) target = $region5
    $region4: #{tpu_custom_call.1} parent=1 // pred_region
      _
    $region5: #{tpu_custom_call.1} parent=1 // pred_fallthru
      _
    // Predicated region
    $region6: #{tpu_custom_call.1} parent=1 // pred_check
      _
    $region7: #{tpu_custom_call.1} parent=1 // pred_check_branch
      %14 = sbr.rel (0) target = $region9
    $region8: #{tpu_custom_call.1} parent=1 // pred_region
      _
    $region9: #{tpu_custom_call.1} parent=1 // pred_fallthru
      _
    // Predicated region
    $region10: #{tpu_custom_call.1} parent=1 // pred_check
      _
    $region11: #{tpu_custom_call.1} parent=1 // pred_check_branch
      %16 = sbr.rel (0) target = $region13
    $region12: #{tpu_custom_call.1} parent=1 // pred_region
      _
    $region13: #{tpu_custom_call.1} parent=1 // pred_fallthru
      _
    // Predicated region
    $region14: #{tpu_custom_call.1} parent=1 // pred_check
      _
    $region15: #{tpu_custom_call.1} parent=1 // pred_check_branch
      %18 = sbr.rel (0) target = $region17
    $region16: #{tpu_custom_call.1} parent=1 // pred_region
      _
    $region17: #{tpu_custom_call.1} parent=1 // pred_fallthru
      _
    // Predicated region
    $region18: #{tpu_custom_call.1} parent=1 // pred_check
      _
    $region19: #{tpu_custom_call.1} parent=1 // pred_check_branch
      %20 = sbr.rel (0) target = $region21
    $region20: #{tpu_custom_call.1} parent=1 // pred_region
      _
    $region21: #{tpu_custom_call.1} parent=1 // pred_fallthru
      _
    %v21 = vld [vmem:[%s0] sm:$0xff]
    %v22 = vld [vmem:[%s0 + $0x8] sm:$0xff]
    %v23 = vld [vmem:[%s0 + $0x10] sm:$0xff]
    %v24 = vld [vmem:[%s0 + $0x18] sm:$0xff]
    %v25 = vld [vmem:[%s0 + $0x20] sm:$0xff]
    %v26 = vld [vmem:[%s0 + $0x28] sm:$0xff]
    %v27 = vld [vmem:[%s0 + $0x30] sm:$0xff]
    %v28 = vld [vmem:[%s0 + $0x38] sm:$0xff]
    %v29 = vld [vmem:[%s0 + $0x40] sm:$0xff]
    %v30 = vld [vmem:[%s0 + $0x48] sm:$0xff]
    %v31 = vld [vmem:[%s0 + $0x50] sm:$0xff]
    %v32 = vld [vmem:[%s0 + $0x58] sm:$0xff]
    %v33 = vld [vmem:[%s0 + $0x60] sm:$0xff]
    %v34 = vld [vmem:[%s0 + $0x68] sm:$0xff]
    %v35 = vld [vmem:[%s0 + $0x70] sm:$0xff]
    %v36 = vld [vmem:[%s0 + $0x78] sm:$0xff]
    %v37 = vld [vmem:[%s0 + $0x80] sm:$0xff]
    %v38 = vld [vmem:[%s0 + $0x88] sm:$0xff]
    %v39 = vld [vmem:[%s0 + $0x90] sm:$0xff]
    %v40 = vld [vmem:[%s0 + $0x98] sm:$0xff]
    %v41 = vld [vmem:[%s0 + $0xa0] sm:$0xff]
    %v42 = vld [vmem:[%s0 + $0xa8] sm:$0xff]
    %v43 = vld [vmem:[%s0 + $0xb0] sm:$0xff]
    %v44 = vld [vmem:[%s0 + $0xb8] sm:$0xff]
    %v45 = vld [vmem:[%s0 + $0xc0] sm:$0xff]
    %v46 = vld [vmem:[%s0 + $0xc8] sm:$0xff]
    %v47 = vld [vmem:[%s0 + $0xd0] sm:$0xff]
    %v48 = vld [vmem:[%s0 + $0xd8] sm:$0xff]
    %v49 = vld [vmem:[%s0 + $0xe0] sm:$0xff]
    %v50 = vld [vmem:[%s0 + $0xe8] sm:$0xff]
    %v51 = vld [vmem:[%s0 + $0xf0] sm:$0xff]
    %v52 = vld [vmem:[%s0 + $0xf8] sm:$0xff]
    %v53 = vld [vmem:[%s1] sm:$0x3]
    %v54 = vld [vmem:[%s2] sm:$0xff]
    %v55 = vld [vmem:[%s2 + $0x8] sm:$0xff]
    %v56 = vld [vmem:[%s2 + $0x10] sm:$0xff]
    %v57 = vld [vmem:[%s2 + $0x18] sm:$0xff]
    %vm58 = vcmask 261120
    %v60 = vsel %vm58, %v21, 0
    %v63 = vsel %vm58, %v22, 0
    %v66 = vsel %vm58, %v23, 0
    %v69 = vsel %vm58, %v24, 0
    %v72 = vsel %vm58, %v25, 0
    %v75 = vsel %vm58, %v26, 0
    %v78 = vsel %vm58, %v27, 0
    %v81 = vsel %vm58, %v28, 0
    %v84 = vsel %vm58, %v29, 0
    %v87 = vsel %vm58, %v30, 0
    %v90 = vsel %vm58, %v31, 0
    %v93 = vsel %vm58, %v32, 0
    %v96 = vsel %vm58, %v33, 0
    %v99 = vsel %vm58, %v34, 0
    %v102 = vsel %vm58, %v35, 0
    %v105 = vsel %vm58, %v36, 0
    %v108 = vsel %vm58, %v37, 0
    %v111 = vsel %vm58, %v38, 0
    %v114 = vsel %vm58, %v39, 0
    %v117 = vsel %vm58, %v40, 0
    %v120 = vsel %vm58, %v41, 0
    %v123 = vsel %vm58, %v42, 0
    %v126 = vsel %vm58, %v43, 0
    %v129 = vsel %vm58, %v44, 0
    %v132 = vsel %vm58, %v45, 0
    %v135 = vsel %vm58, %v46, 0
    %v138 = vsel %vm58, %v47, 0
    %v141 = vsel %vm58, %v48, 0
    %v144 = vsel %vm58, %v49, 0
    %v147 = vsel %vm58, %v50, 0
    %v150 = vsel %vm58, %v51, 0
    %v153 = vsel %vm58, %v52, 0
    %155 = vmatprep.subr.mxu0 0.0
    %156 = vmatpush1.msra.mxu0 %v54
    %157 = vmatprep.subr.mxu0 0.0
    %158 = vmatpush1.msra.mxu0 %v55
    %159 = vmatprep.subr.mxu0 0.0
    %160 = vmatpush1.msra.mxu0 %v56
    %161 = vmatprep.subr.mxu0 0.0
    %162 = vmatpush1.msra.mxu0 %v57
    %163 = vmatprep.subr.mxu0 0.0
    %164 = vmatpush1.msra.mxu0 0.0
    %165 = vmatprep.subr.mxu0 0.0
    %166 = vmatpush1.msra.mxu0 0.0
    %167 = vmatprep.subr.mxu0 0.0
    %168 = vmatpush1.msra.mxu0 0.0
    %169 = vmatprep.subr.mxu0 0.0
    %170 = vmatpush1.msra.mxu0 0.0
    %171 = vmatprep.subr.mxu0 0.0
    %172 = vmatpush1.msra.mxu0 0.0
    %173 = vmatprep.subr.mxu0 0.0
    %174 = vmatpush1.msra.mxu0 0.0
    %175 = vmatprep.subr.mxu0 0.0
    %176 = vmatpush1.msra.mxu0 0.0
    %177 = vmatprep.subr.mxu0 0.0
    %178 = vmatpush1.msra.mxu0 0.0
    %179 = vmatprep.subr.mxu0 0.0
    %180 = vmatpush1.msra.mxu0 0.0
    %181 = vmatprep.subr.mxu0 0.0
    %182 = vmatpush1.msra.mxu0 0.0
    %183 = vmatprep.subr.mxu0 0.0
    %184 = vmatpush1.msra.mxu0 0.0
    %185 = vmatprep.subr.mxu0 0.0
    %186 = vmatpush1.msra.mxu0 0.0
    %187 = vmatprep.subr.mxu0 0.0
    %188 = vmatpush1.msra.mxu0 0.0
    %189 = vmatprep.subr.mxu0 0.0
    %190 = vmatpush1.msra.mxu0 0.0
    %191 = vmatprep.subr.mxu0 0.0
    %192 = vmatpush1.msra.mxu0 0.0
    %193 = vmatprep.subr.mxu0 0.0
    %194 = vmatpush1.msra.mxu0 0.0
    %195 = vmatprep.subr.mxu0 0.0
    %196 = vmatpush1.msra.mxu0 0.0
    %197 = vmatprep.subr.mxu0 0.0
    %198 = vmatpush1.msra.mxu0 0.0
    %199 = vmatprep.subr.mxu0 0.0
    %200 = vmatpush1.msra.mxu0 0.0
    %201 = vmatprep.subr.mxu0 0.0
    %202 = vmatpush1.msra.mxu0 0.0
    %203 = vmatprep.subr.mxu0 0.0
    %204 = vmatpush1.msra.mxu0 0.0
    %205 = vmatprep.subr.mxu0 0.0
    %206 = vmatpush1.msra.mxu0 0.0
    %207 = vmatprep.subr.mxu0 0.0
    %208 = vmatpush1.msra.mxu0 0.0
    %209 = vmatprep.subr.mxu0 0.0
    %210 = vmatpush1.msra.mxu0 0.0
    %211 = vmatprep.subr.mxu0 0.0
    %212 = vmatpush1.msra.mxu0 0.0
    %213 = vmatprep.subr.mxu0 0.0
    %214 = vmatpush1.msra.mxu0 0.0
    %215 = vmatprep.subr.mxu0 0.0
    %216 = vmatpush1.msra.mxu0 0.0
    %217 = vmatprep.subr.mxu0 0.0
    %218 = vmatpush1.msra.mxu0 0.0
    %219 = vmatprep.mubr.f32.mxu0 0.0
    %220 = vmatmul.mubr.f32.gmra.mrb[0].mxu0 %v60
    %v221 = vpop.f32.mrb[0].mxu0
    %v222 = vadd.f32 0.0, %v221
    %v223 = vpop.f32.mrb[0].mxu0
    %224 = vmatprep.mubr.f32.mxu0 0.0
    %225 = vmatmul.mubr.f32.gmra.mrb[0].mxu0 %v63
    %v226 = vpop.f32.mrb[0].mxu0
    %v227 = vadd.f32 0.0, %v226
    %v228 = vpop.f32.mrb[0].mxu0
    %229 = vmatprep.mubr.f32.mxu0 0.0
    %230 = vmatmul.mubr.f32.gmra.mrb[0].mxu0 %v66
    %v231 = vpop.f32.mrb[0].mxu0
    %v232 = vadd.f32 0.0, %v231
    %v233 = vpop.f32.mrb[0].mxu0
    %234 = vmatprep.mubr.f32.mxu0 0.0
    %235 = vmatmul.mubr.f32.gmra.mrb[0].mxu0 %v69
    %v236 = vpop.f32.mrb[0].mxu0
    %v237 = vadd.f32 0.0, %v236
    %v238 = vpop.f32.mrb[0].mxu0
    %239 = vmatprep.mubr.f32.mxu0 0.0
    %240 = vmatmul.mubr.f32.gmra.mrb[0].mxu0 %v72
    %v241 = vpop.f32.mrb[0].mxu0
    %v242 = vadd.f32 0.0, %v241
    %v243 = vpop.f32.mrb[0].mxu0
    %244 = vmatprep.mubr.f32.mxu0 0.0
    %245 = vmatmul.mubr.f32.gmra.mrb[0].mxu0 %v75
    %v246 = vpop.f32.mrb[0].mxu0
    %v247 = vadd.f32 0.0, %v246
    %v248 = vpop.f32.mrb[0].mxu0
    %249 = vmatprep.mubr.f32.mxu0 0.0
    %250 = vmatmul.mubr.f32.gmra.mrb[0].mxu0 %v78
    %v251 = vpop.f32.mrb[0].mxu0
    %v252 = vadd.f32 0.0, %v251
    %v253 = vpop.f32.mrb[0].mxu0
    %254 = vmatprep.mubr.f32.mxu0 0.0
    %255 = vmatmul.mubr.f32.gmra.mrb[0].mxu0 %v81
    %v256 = vpop.f32.mrb[0].mxu0
    %v257 = vadd.f32 0.0, %v256
    %v258 = vpop.f32.mrb[0].mxu0
    %259 = vmatprep.mubr.f32.mxu0 0.0
    %260 = vmatmul.mubr.f32.gmra.mrb[0].mxu0 %v84
    %v261 = vpop.f32.mrb[0].mxu0
    %v262 = vadd.f32 0.0, %v261
    %v263 = vpop.f32.mrb[0].mxu0
    %264 = vmatprep.mubr.f32.mxu0 0.0
    %265 = vmatmul.mubr.f32.gmra.mrb[0].mxu0 %v87
    %v266 = vpop.f32.mrb[0].mxu0
    %v267 = vadd.f32 0.0, %v266
    %v268 = vpop.f32.mrb[0].mxu0
    %269 = vmatprep.mubr.f32.mxu0 0.0
    %270 = vmatmul.mubr.f32.gmra.mrb[0].mxu0 %v90
    %v271 = vpop.f32.mrb[0].mxu0
    %v272 = vadd.f32 0.0, %v271
    %v273 = vpop.f32.mrb[0].mxu0
    %274 = vmatprep.mubr.f32.mxu0 0.0
    %275 = vmatmul.mubr.f32.gmra.mrb[0].mxu0 %v93
    %v276 = vpop.f32.mrb[0].mxu0
    %v277 = vadd.f32 0.0, %v276
    %v278 = vpop.f32.mrb[0].mxu0
    %279 = vmatprep.mubr.f32.mxu0 0.0
    %280 = vmatmul.mubr.f32.gmra.mrb[0].mxu0 %v96
    %v281 = vpop.f32.mrb[0].mxu0
    %v282 = vadd.f32 0.0, %v281
    %v283 = vpop.f32.mrb[0].mxu0
    %284 = vmatprep.mubr.f32.mxu0 0.0
    %285 = vmatmul.mubr.f32.gmra.mrb[0].mxu0 %v99
    %v286 = vpop.f32.mrb[0].mxu0
    %v287 = vadd.f32 0.0, %v286
    %v288 = vpop.f32.mrb[0].mxu0
    %289 = vmatprep.mubr.f32.mxu0 0.0
    %290 = vmatmul.mubr.f32.gmra.mrb[0].mxu0 %v102
    %v291 = vpop.f32.mrb[0].mxu0
    %v292 = vadd.f32 0.0, %v291
    %v293 = vpop.f32.mrb[0].mxu0
    %294 = vmatprep.mubr.f32.mxu0 0.0
    %295 = vmatmul.mubr.f32.gmra.mrb[0].mxu0 %v105
    %v296 = vpop.f32.mrb[0].mxu0
    %v297 = vadd.f32 0.0, %v296
    %v298 = vpop.f32.mrb[0].mxu0
    %299 = vmatprep.mubr.f32.mxu0 0.0
    %300 = vmatmul.mubr.f32.gmra.mrb[0].mxu0 %v108
    %v301 = vpop.f32.mrb[0].mxu0
    %v302 = vadd.f32 0.0, %v301
    %v303 = vpop.f32.mrb[0].mxu0
    %304 = vmatprep.mubr.f32.mxu0 0.0
    %305 = vmatmul.mubr.f32.gmra.mrb[0].mxu0 %v111
    %v306 = vpop.f32.mrb[0].mxu0
    %v307 = vadd.f32 0.0, %v306
    %v308 = vpop.f32.mrb[0].mxu0
    %309 = vmatprep.mubr.f32.mxu0 0.0
    %310 = vmatmul.mubr.f32.gmra.mrb[0].mxu0 %v114
    %v311 = vpop.f32.mrb[0].mxu0
    %v312 = vadd.f32 0.0, %v311
    %v313 = vpop.f32.mrb[0].mxu0
    %314 = vmatprep.mubr.f32.mxu0 0.0
    %315 = vmatmul.mubr.f32.gmra.mrb[0].mxu0 %v117
    %v316 = vpop.f32.mrb[0].mxu0
    %v317 = vadd.f32 0.0, %v316
    %v318 = vpop.f32.mrb[0].mxu0
    %319 = vmatprep.mubr.f32.mxu0 0.0
    %320 = vmatmul.mubr.f32.gmra.mrb[0].mxu0 %v120
    %v321 = vpop.f32.mrb[0].mxu0
    %v322 = vadd.f32 0.0, %v321
    %v323 = vpop.f32.mrb[0].mxu0
    %324 = vmatprep.mubr.f32.mxu0 0.0
    %325 = vmatmul.mubr.f32.gmra.mrb[0].mxu0 %v123
    %v326 = vpop.f32.mrb[0].mxu0
    %v327 = vadd.f32 0.0, %v326
    %v328 = vpop.f32.mrb[0].mxu0
    %329 = vmatprep.mubr.f32.mxu0 0.0
    %330 = vmatmul.mubr.f32.gmra.mrb[0].mxu0 %v126
    %v331 = vpop.f32.mrb[0].mxu0
    %v332 = vadd.f32 0.0, %v331
    %v333 = vpop.f32.mrb[0].mxu0
    %334 = vmatprep.mubr.f32.mxu0 0.0
    %335 = vmatmul.mubr.f32.gmra.mrb[0].mxu0 %v129
    %v336 = vpop.f32.mrb[0].mxu0
    %v337 = vadd.f32 0.0, %v336
    %v338 = vpop.f32.mrb[0].mxu0
    %339 = vmatprep.mubr.f32.mxu0 0.0
    %340 = vmatmul.mubr.f32.gmra.mrb[0].mxu0 %v132
    %v341 = vpop.f32.mrb[0].mxu0
    %v342 = vadd.f32 0.0, %v341
    %v343 = vpop.f32.mrb[0].mxu0
    %344 = vmatprep.mubr.f32.mxu0 0.0
    %345 = vmatmul.mubr.f32.gmra.mrb[0].mxu0 %v135
    %v346 = vpop.f32.mrb[0].mxu0
    %v347 = vadd.f32 0.0, %v346
    %v348 = vpop.f32.mrb[0].mxu0
    %349 = vmatprep.mubr.f32.mxu0 0.0
    %350 = vmatmul.mubr.f32.gmra.mrb[0].mxu0 %v138
    %v351 = vpop.f32.mrb[0].mxu0
    %v352 = vadd.f32 0.0, %v351
    %v353 = vpop.f32.mrb[0].mxu0
    %354 = vmatprep.mubr.f32.mxu0 0.0
    %355 = vmatmul.mubr.f32.gmra.mrb[0].mxu0 %v141
    %v356 = vpop.f32.mrb[0].mxu0
    %v357 = vadd.f32 0.0, %v356
    %v358 = vpop.f32.mrb[0].mxu0
    %359 = vmatprep.mubr.f32.mxu0 0.0
    %360 = vmatmul.mubr.f32.gmra.mrb[0].mxu0 %v144
    %v361 = vpop.f32.mrb[0].mxu0
    %v362 = vadd.f32 0.0, %v361
    %v363 = vpop.f32.mrb[0].mxu0
    %364 = vmatprep.mubr.f32.mxu0 0.0
    %365 = vmatmul.mubr.f32.gmra.mrb[0].mxu0 %v147
    %v366 = vpop.f32.mrb[0].mxu0
    %v367 = vadd.f32 0.0, %v366
    %v368 = vpop.f32.mrb[0].mxu0
    %369 = vmatprep.mubr.f32.mxu0 0.0
    %370 = vmatmul.mubr.f32.gmra.mrb[0].mxu0 %v150
    %v371 = vpop.f32.mrb[0].mxu0
    %v372 = vadd.f32 0.0, %v371
    %v373 = vpop.f32.mrb[0].mxu0
    %374 = vmatprep.mubr.f32.mxu0 0.0
    %375 = vmatmul.mubr.f32.gmra.mrb[0].mxu0 %v153
    %v376 = vpop.f32.mrb[0].mxu0
    %v377 = vadd.f32 0.0, %v376
    %v378 = vpop.f32.mrb[0].mxu0
    %379 = vdwg.mxu0
    %v380 = vld [vmem:[%s3] sm:$0xff]
    %v381 = vld [vmem:[%s3 + $0x8] sm:$0xff]
    %v382 = vld [vmem:[%s3 + $0x10] sm:$0xff]
    %v383 = vld [vmem:[%s3 + $0x18] sm:$0xff]
    %v385 = vsel %vm58, %v53, 0
    %387 = vmatprep.subr.mxu0 0.0
    %388 = vmatpush1.msra.mxu0 %v380
    %389 = vmatprep.subr.mxu0 0.0
    %390 = vmatpush1.msra.mxu0 %v381
    %391 = vmatprep.subr.mxu0 0.0
    %392 = vmatpush1.msra.mxu0 %v382
    %393 = vmatprep.subr.mxu0 0.0
    %394 = vmatpush1.msra.mxu0 %v383
    %395 = vmatprep.subr.mxu0 0.0
    %396 = vmatpush1.msra.mxu0 0.0
    %397 = vmatprep.subr.mxu0 0.0
    %398 = vmatpush1.msra.mxu0 0.0
    %399 = vmatprep.subr.mxu0 0.0
    %400 = vmatpush1.msra.mxu0 0.0
    %401 = vmatprep.subr.mxu0 0.0
    %402 = vmatpush1.msra.mxu0 0.0
    %403 = vmatprep.subr.mxu0 0.0
    %404 = vmatpush1.msra.mxu0 0.0
    %405 = vmatprep.subr.mxu0 0.0
    %406 = vmatpush1.msra.mxu0 0.0
    %407 = vmatprep.subr.mxu0 0.0
    %408 = vmatpush1.msra.mxu0 0.0
    %409 = vmatprep.subr.mxu0 0.0
    %410 = vmatpush1.msra.mxu0 0.0
    %411 = vmatprep.subr.mxu0 0.0
    %412 = vmatpush1.msra.mxu0 0.0
    %413 = vmatprep.subr.mxu0 0.0
    %414 = vmatpush1.msra.mxu0 0.0
    %415 = vmatprep.subr.mxu0 0.0
    %416 = vmatpush1.msra.mxu0 0.0
    %417 = vmatprep.subr.mxu0 0.0
    %418 = vmatpush1.msra.mxu0 0.0
    %419 = vmatprep.subr.mxu0 0.0
    %420 = vmatpush1.msra.mxu0 0.0
    %421 = vmatprep.subr.mxu0 0.0
    %422 = vmatpush1.msra.mxu0 0.0
    %423 = vmatprep.subr.mxu0 0.0
    %424 = vmatpush1.msra.mxu0 0.0
    %425 = vmatprep.subr.mxu0 0.0
    %426 = vmatpush1.msra.mxu0 0.0
    %427 = vmatprep.subr.mxu0 0.0
    %428 = vmatpush1.msra.mxu0 0.0
    %429 = vmatprep.subr.mxu0 0.0
    %430 = vmatpush1.msra.mxu0 0.0
    %431 = vmatprep.subr.mxu0 0.0
    %432 = vmatpush1.msra.mxu0 0.0
    %433 = vmatprep.subr.mxu0 0.0
    %434 = vmatpush1.msra.mxu0 0.0
    %435 = vmatprep.subr.mxu0 0.0
    %436 = vmatpush1.msra.mxu0 0.0
    %437 = vmatprep.subr.mxu0 0.0
    %438 = vmatpush1.msra.mxu0 0.0
    %439 = vmatprep.subr.mxu0 0.0
    %440 = vmatpush1.msra.mxu0 0.0
    %441 = vmatprep.subr.mxu0 0.0
    %442 = vmatpush1.msra.mxu0 0.0
    %443 = vmatprep.subr.mxu0 0.0
    %444 = vmatpush1.msra.mxu0 0.0
    %445 = vmatprep.subr.mxu0 0.0
    %446 = vmatpush1.msra.mxu0 0.0
    %447 = vmatprep.subr.mxu0 0.0
    %448 = vmatpush1.msra.mxu0 0.0
    %449 = vmatprep.subr.mxu0 0.0
    %450 = vmatpush1.msra.mxu0 0.0
    %451 = vmatprep.mubr.f32.mxu0 0.0
    %452 = vmatmul.mubr.f32.gmra.mrb[0].mxu0 %v385
    %v453 = vpop.f32.mrb[0].mxu0
    %v454 = vadd.f32 0.0, %v453
    %v455 = vpop.f32.mrb[0].mxu0
    %456 = vdwg.mxu0
    %v459 = vunpack.c.l.s4 1966171168
    %v460 = vunpack.c.0.s8 %v459
    %v461 = vlaneseq
    %v462 = vshrl.u32 %v461, 7
    %v463 = vsub.s32 %v460, %v462
    %v464 = vrot.slane %v454, %v463
    %v465 = vcombine.high %v464, %v464
    %v467 = vunpack.c.l.s4 1966171168
    %v468 = vunpack.c.0.s8 %v467
    %v469 = vlaneseq
    %v470 = vshrl.u32 %v469, 7
    %v471 = vsub.s32 %v468, %v470
    %v472 = vrot.slane %v464, %v471
    %v474 = vunpack.c.l.s4 1966171168
    %v475 = vunpack.c.0.s8 %v474
    %v476 = vlaneseq
    %v477 = vshrl.u32 %v476, 7
    %v478 = vsub.s32 %v475, %v477
    %v479 = vrot.slane %v465, %v478
    %v480 = vlaneseq
    %v481 = vshrl.u32 %v480, 7
    %v482 = vsub.s32 0, %v481
    %v483 = vrot.slane %v472, %v482
    %v484 = vlaneseq
    %v485 = vshrl.u32 %v484, 7
    %v486 = vsub.s32 0, %v485
    %v487 = vrot.slane %v479, %v486
    %v490 = vadd.f32 %v222, %v483
    %v491 = vadd.f32 %v227, %v483
    %v492 = vadd.f32 %v232, %v483
    %v493 = vadd.f32 %v237, %v483
    %v494 = vadd.f32 %v242, %v483
    %v495 = vadd.f32 %v247, %v483
    %v496 = vadd.f32 %v252, %v483
    %v497 = vadd.f32 %v257, %v483
    %v498 = vadd.f32 %v262, %v483
    %v499 = vadd.f32 %v267, %v483
    %v500 = vadd.f32 %v272, %v483
    %v501 = vadd.f32 %v277, %v483
    %v502 = vadd.f32 %v282, %v483
    %v503 = vadd.f32 %v287, %v483
    %v504 = vadd.f32 %v292, %v483
    %v505 = vadd.f32 %v297, %v483
    %v506 = vadd.f32 %v302, %v487
    %v507 = vadd.f32 %v307, %v487
    %v508 = vadd.f32 %v312, %v487
    %v509 = vadd.f32 %v317, %v487
    %v510 = vadd.f32 %v322, %v487
    %v511 = vadd.f32 %v327, %v487
    %v512 = vadd.f32 %v332, %v487
    %v513 = vadd.f32 %v337, %v487
    %v514 = vadd.f32 %v342, %v487
    %v515 = vadd.f32 %v347, %v487
    %v516 = vadd.f32 %v352, %v487
    %v517 = vadd.f32 %v357, %v487
    %v518 = vadd.f32 %v362, %v487
    %v519 = vadd.f32 %v367, %v487
    %v520 = vadd.f32 %v372, %v487
    %v521 = vadd.f32 %v377, %v487
    %v522 = vtanh.pop %v490
    %v523 = vtanh.pop %v491
    %v524 = vtanh.pop %v492
    %v525 = vtanh.pop %v493
    %v526 = vtanh.pop %v494
    %v527 = vtanh.pop %v495
    %v528 = vtanh.pop %v496
    %v529 = vtanh.pop %v497
    %v530 = vtanh.pop %v498
    %v531 = vtanh.pop %v499
    %v532 = vtanh.pop %v500
    %v533 = vtanh.pop %v501
    %v534 = vtanh.pop %v502
    %v535 = vtanh.pop %v503
    %v536 = vtanh.pop %v504
    %v537 = vtanh.pop %v505
    %v538 = vtanh.pop %v506
    %v539 = vtanh.pop %v507
    %v540 = vtanh.pop %v508
    %v541 = vtanh.pop %v509
    %v542 = vtanh.pop %v510
    %v543 = vtanh.pop %v511
    %v544 = vtanh.pop %v512
    %v545 = vtanh.pop %v513
    %v546 = vtanh.pop %v514
    %v547 = vtanh.pop %v515
    %v548 = vtanh.pop %v516
    %v549 = vtanh.pop %v517
    %v550 = vtanh.pop %v518
    %v551 = vtanh.pop %v519
    %v552 = vtanh.pop %v520
    %v553 = vtanh.pop %v521
    %v554 = vld [vmem:[%s4] sm:$0x1]
    %v556 = vlaneseq
    %v557 = vshrl.u32 %v556, 7
    %v558 = vsub.s32 0, %v557
    %v559 = vrot.slane %v554, %v558
    %v561 = vmul.f32 %v522, %v559
    %v562 = vmul.f32 %v523, %v559
    %v563 = vmul.f32 %v524, %v559
    %v564 = vmul.f32 %v525, %v559
    %v565 = vmul.f32 %v526, %v559
    %v566 = vmul.f32 %v527, %v559
    %v567 = vmul.f32 %v528, %v559
    %v568 = vmul.f32 %v529, %v559
    %v569 = vmul.f32 %v530, %v559
    %v570 = vmul.f32 %v531, %v559
    %v571 = vmul.f32 %v532, %v559
    %v572 = vmul.f32 %v533, %v559
    %v573 = vmul.f32 %v534, %v559
    %v574 = vmul.f32 %v535, %v559
    %v575 = vmul.f32 %v536, %v559
    %v576 = vmul.f32 %v537, %v559
    %v577 = vmul.f32 %v538, %v559
    %v578 = vmul.f32 %v539, %v559
    %v579 = vmul.f32 %v540, %v559
    %v580 = vmul.f32 %v541, %v559
    %v581 = vmul.f32 %v542, %v559
    %v582 = vmul.f32 %v543, %v559
    %v583 = vmul.f32 %v544, %v559
    %v584 = vmul.f32 %v545, %v559
    %v585 = vmul.f32 %v546, %v559
    %v586 = vmul.f32 %v547, %v559
    %v587 = vmul.f32 %v548, %v559
    %v588 = vmul.f32 %v549, %v559
    %v589 = vmul.f32 %v550, %v559
    %v590 = vmul.f32 %v551, %v559
    %v591 = vmul.f32 %v552, %v559
    %v592 = vmul.f32 %v553, %v559
    %v593 = vsel %vm58, %v561, 0.0
    %594 = vadd.xlane.f32.xlu0 %v593
    %v595 = vpop.xlane.xlu0 %594
    %v596 = vsel %vm58, %v562, 0.0
    %597 = vadd.xlane.f32.xlu0 %v596
    %v598 = vpop.xlane.xlu0 %597
    %v599 = vsel %vm58, %v563, 0.0
    %600 = vadd.xlane.f32.xlu0 %v599
    %v601 = vpop.xlane.xlu0 %600
    %v602 = vsel %vm58, %v564, 0.0
    %603 = vadd.xlane.f32.xlu0 %v602
    %v604 = vpop.xlane.xlu0 %603
    %v605 = vsel %vm58, %v565, 0.0
    %606 = vadd.xlane.f32.xlu0 %v605
    %v607 = vpop.xlane.xlu0 %606
    %v608 = vsel %vm58, %v566, 0.0
    %609 = vadd.xlane.f32.xlu0 %v608
    %v610 = vpop.xlane.xlu0 %609
    %v611 = vsel %vm58, %v567, 0.0
    %612 = vadd.xlane.f32.xlu0 %v611
    %v613 = vpop.xlane.xlu0 %612
    %v614 = vsel %vm58, %v568, 0.0
    %615 = vadd.xlane.f32.xlu0 %v614
    %v616 = vpop.xlane.xlu0 %615
    %v617 = vsel %vm58, %v569, 0.0
    %618 = vadd.xlane.f32.xlu0 %v617
    %v619 = vpop.xlane.xlu0 %618
    %v620 = vsel %vm58, %v570, 0.0
    %621 = vadd.xlane.f32.xlu0 %v620
    %v622 = vpop.xlane.xlu0 %621
    %v623 = vsel %vm58, %v571, 0.0
    %624 = vadd.xlane.f32.xlu0 %v623
    %v625 = vpop.xlane.xlu0 %624
    %v626 = vsel %vm58, %v572, 0.0
    %627 = vadd.xlane.f32.xlu0 %v626
    %v628 = vpop.xlane.xlu0 %627
    %v629 = vsel %vm58, %v573, 0.0
    %630 = vadd.xlane.f32.xlu0 %v629
    %v631 = vpop.xlane.xlu0 %630
    %v632 = vsel %vm58, %v574, 0.0
    %633 = vadd.xlane.f32.xlu0 %v632
    %v634 = vpop.xlane.xlu0 %633
    %v635 = vsel %vm58, %v575, 0.0
    %636 = vadd.xlane.f32.xlu0 %v635
    %v637 = vpop.xlane.xlu0 %636
    %v638 = vsel %vm58, %v576, 0.0
    %639 = vadd.xlane.f32.xlu0 %v638
    %v640 = vpop.xlane.xlu0 %639
    %v641 = vsel %vm58, %v577, 0.0
    %642 = vadd.xlane.f32.xlu0 %v641
    %v643 = vpop.xlane.xlu0 %642
    %v644 = vsel %vm58, %v578, 0.0
    %645 = vadd.xlane.f32.xlu0 %v644
    %v646 = vpop.xlane.xlu0 %645
    %v647 = vsel %vm58, %v579, 0.0
    %648 = vadd.xlane.f32.xlu0 %v647
    %v649 = vpop.xlane.xlu0 %648
    %v650 = vsel %vm58, %v580, 0.0
    %651 = vadd.xlane.f32.xlu0 %v650
    %v652 = vpop.xlane.xlu0 %651
    %v653 = vsel %vm58, %v581, 0.0
    %654 = vadd.xlane.f32.xlu0 %v653
    %v655 = vpop.xlane.xlu0 %654
    %v656 = vsel %vm58, %v582, 0.0
    %657 = vadd.xlane.f32.xlu0 %v656
    %v658 = vpop.xlane.xlu0 %657
    %v659 = vsel %vm58, %v583, 0.0
    %660 = vadd.xlane.f32.xlu0 %v659
    %v661 = vpop.xlane.xlu0 %660
    %v662 = vsel %vm58, %v584, 0.0
    %663 = vadd.xlane.f32.xlu0 %v662
    %v664 = vpop.xlane.xlu0 %663
    %v665 = vsel %vm58, %v585, 0.0
    %666 = vadd.xlane.f32.xlu0 %v665
    %v667 = vpop.xlane.xlu0 %666
    %v668 = vsel %vm58, %v586, 0.0
    %669 = vadd.xlane.f32.xlu0 %v668
    %v670 = vpop.xlane.xlu0 %669
    %v671 = vsel %vm58, %v587, 0.0
    %672 = vadd.xlane.f32.xlu0 %v671
    %v673 = vpop.xlane.xlu0 %672
    %v674 = vsel %vm58, %v588, 0.0
    %675 = vadd.xlane.f32.xlu0 %v674
    %v676 = vpop.xlane.xlu0 %675
    %v677 = vsel %vm58, %v589, 0.0
    %678 = vadd.xlane.f32.xlu0 %v677
    %v679 = vpop.xlane.xlu0 %678
    %v680 = vsel %vm58, %v590, 0.0
    %681 = vadd.xlane.f32.xlu0 %v680
    %v682 = vpop.xlane.xlu0 %681
    %v683 = vsel %vm58, %v591, 0.0
    %684 = vadd.xlane.f32.xlu0 %v683
    %v685 = vpop.xlane.xlu0 %684
    %v686 = vsel %vm58, %v592, 0.0
    %687 = vadd.xlane.f32.xlu0 %v686
    %v688 = vpop.xlane.xlu0 %687
    %v689 = vlaneseq
    %v690 = vand.u32 %v689, 127
    %vm691 = vcmp.lt.s32.totalorder %v690, 8
    %v724 = vlaneseq
    %v725 = vshrl.u32 %v724, 7
    %v726 = vsub.s32 %v690, %v725
    %v727 = vrot.slane %v595, %v726
    %v728 = vadd.s32 %v690, 4294967288
    %v729 = vlaneseq
    %v730 = vshrl.u32 %v729, 7
    %v731 = vsub.s32 %v728, %v730
    %v732 = vrot.slane %v598, %v731
    %vm733 = vcmask 130112
    %v734 = vsel %vm733, %v732, %v727
    %v735 = vadd.s32 %v690, 4294967280
    %v736 = vlaneseq
    %v737 = vshrl.u32 %v736, 7
    %v738 = vsub.s32 %v735, %v737
    %v739 = vrot.slane %v601, %v738
    %vm740 = vcmask 195712
    %v741 = vsel %vm740, %v739, %v734
    %v742 = vadd.s32 %v690, 4294967272
    %v743 = vlaneseq
    %v744 = vshrl.u32 %v743, 7
    %v745 = vsub.s32 %v742, %v744
    %v746 = vrot.slane %v604, %v745
    %vm747 = vcmask 261312
    %v748 = vsel %vm747, %v746, %v741
    %v749 = vadd.s32 %v690, 4294967264
    %v750 = vlaneseq
    %v751 = vshrl.u32 %v750, 7
    %v752 = vsub.s32 %v749, %v751
    %v753 = vrot.slane %v607, %v752
    %vm754 = vcmask 326912
    %v755 = vsel %vm754, %v753, %v748
    %v756 = vadd.s32 %v690, 4294967256
    %v757 = vlaneseq
    %v758 = vshrl.u32 %v757, 7
    %v759 = vsub.s32 %v756, %v758
    %v760 = vrot.slane %v610, %v759
    %vm761 = vcmask 392512
    %v762 = vsel %vm761, %v760, %v755
    %v763 = vadd.s32 %v690, 4294967248
    %v764 = vlaneseq
    %v765 = vshrl.u32 %v764, 7
    %v766 = vsub.s32 %v763, %v765
    %v767 = vrot.slane %v613, %v766
    %vm768 = vcmask 458112
    %v769 = vsel %vm768, %v767, %v762
    %v770 = vadd.s32 %v690, 4294967240
    %v771 = vlaneseq
    %v772 = vshrl.u32 %v771, 7
    %v773 = vsub.s32 %v770, %v772
    %v774 = vrot.slane %v616, %v773
    %vm775 = vcmask 523712
    %v776 = vsel %vm775, %v774, %v769
    %v777 = vadd.s32 %v690, 4294967232
    %v778 = vlaneseq
    %v779 = vshrl.u32 %v778, 7
    %v780 = vsub.s32 %v777, %v779
    %v781 = vrot.slane %v619, %v780
    %vm782 = vcmask 589312
    %v783 = vsel %vm782, %v781, %v776
    %v784 = vadd.s32 %v690, 4294967224
    %v785 = vlaneseq
    %v786 = vshrl.u32 %v785, 7
    %v787 = vsub.s32 %v784, %v786
    %v788 = vrot.slane %v622, %v787
    %vm789 = vcmask 654912
    %v790 = vsel %vm789, %v788, %v783
    %v791 = vadd.s32 %v690, 4294967216
    %v792 = vlaneseq
    %v793 = vshrl.u32 %v792, 7
    %v794 = vsub.s32 %v791, %v793
    %v795 = vrot.slane %v625, %v794
    %vm796 = vcmask 720512
    %v797 = vsel %vm796, %v795, %v790
    %v798 = vadd.s32 %v690, 4294967208
    %v799 = vlaneseq
    %v800 = vshrl.u32 %v799, 7
    %v801 = vsub.s32 %v798, %v800
    %v802 = vrot.slane %v628, %v801
    %vm803 = vcmask 786112
    %v804 = vsel %vm803, %v802, %v797
    %v805 = vadd.s32 %v690, 4294967200
    %v806 = vlaneseq
    %v807 = vshrl.u32 %v806, 7
    %v808 = vsub.s32 %v805, %v807
    %v809 = vrot.slane %v631, %v808
    %vm810 = vcmask 851712
    %v811 = vsel %vm810, %v809, %v804
    %v812 = vadd.s32 %v690, 4294967192
    %v813 = vlaneseq
    %v814 = vshrl.u32 %v813, 7
    %v815 = vsub.s32 %v812, %v814
    %v816 = vrot.slane %v634, %v815
    %vm817 = vcmask 917312
    %v818 = vsel %vm817, %v816, %v811
    %v819 = vadd.s32 %v690, 4294967184
    %v820 = vlaneseq
    %v821 = vshrl.u32 %v820, 7
    %v822 = vsub.s32 %v819, %v821
    %v823 = vrot.slane %v637, %v822
    %vm824 = vcmask 982912
    %v825 = vsel %vm824, %v823, %v818
    %v826 = vadd.s32 %v690, 4294967176
    %v827 = vlaneseq
    %v828 = vshrl.u32 %v827, 7
    %v829 = vsub.s32 %v826, %v828
    %v830 = vrot.slane %v640, %v829
    %vm831 = vcmask 1048512
    %v832 = vsel %vm831, %v830, %v825
    %v833 = vlaneseq
    %v834 = vshrl.u32 %v833, 7
    %v835 = vsub.s32 %v690, %v834
    %v836 = vrot.slane %v643, %v835
    %v837 = vlaneseq
    %v838 = vshrl.u32 %v837, 7
    %v839 = vsub.s32 %v728, %v838
    %v840 = vrot.slane %v646, %v839
    %v841 = vsel %vm733, %v840, %v836
    %v842 = vlaneseq
    %v843 = vshrl.u32 %v842, 7
    %v844 = vsub.s32 %v735, %v843
    %v845 = vrot.slane %v649, %v844
    %v846 = vsel %vm740, %v845, %v841
    %v847 = vlaneseq
    %v848 = vshrl.u32 %v847, 7
    %v849 = vsub.s32 %v742, %v848
    %v850 = vrot.slane %v652, %v849
    %v851 = vsel %vm747, %v850, %v846
    %v852 = vlaneseq
    %v853 = vshrl.u32 %v852, 7
    %v854 = vsub.s32 %v749, %v853
    %v855 = vrot.slane %v655, %v854
    %v856 = vsel %vm754, %v855, %v851
    %v857 = vlaneseq
    %v858 = vshrl.u32 %v857, 7
    %v859 = vsub.s32 %v756, %v858
    %v860 = vrot.slane %v658, %v859
    %v861 = vsel %vm761, %v860, %v856
    %v862 = vlaneseq
    %v863 = vshrl.u32 %v862, 7
    %v864 = vsub.s32 %v763, %v863
    %v865 = vrot.slane %v661, %v864
    %v866 = vsel %vm768, %v865, %v861
    %v867 = vlaneseq
    %v868 = vshrl.u32 %v867, 7
    %v869 = vsub.s32 %v770, %v868
    %v870 = vrot.slane %v664, %v869
    %v871 = vsel %vm775, %v870, %v866
    %v872 = vlaneseq
    %v873 = vshrl.u32 %v872, 7
    %v874 = vsub.s32 %v777, %v873
    %v875 = vrot.slane %v667, %v874
    %v876 = vsel %vm782, %v875, %v871
    %v877 = vlaneseq
    %v878 = vshrl.u32 %v877, 7
    %v879 = vsub.s32 %v784, %v878
    %v880 = vrot.slane %v670, %v879
    %v881 = vsel %vm789, %v880, %v876
    %v882 = vlaneseq
    %v883 = vshrl.u32 %v882, 7
    %v884 = vsub.s32 %v791, %v883
    %v885 = vrot.slane %v673, %v884
    %v886 = vsel %vm796, %v885, %v881
    %v887 = vlaneseq
    %v888 = vshrl.u32 %v887, 7
    %v889 = vsub.s32 %v798, %v888
    %v890 = vrot.slane %v676, %v889
    %v891 = vsel %vm803, %v890, %v886
    %v892 = vlaneseq
    %v893 = vshrl.u32 %v892, 7
    %v894 = vsub.s32 %v805, %v893
    %v895 = vrot.slane %v679, %v894
    %v896 = vsel %vm810, %v895, %v891
    %v897 = vlaneseq
    %v898 = vshrl.u32 %v897, 7
    %v899 = vsub.s32 %v812, %v898
    %v900 = vrot.slane %v682, %v899
    %v901 = vsel %vm817, %v900, %v896
    %v902 = vlaneseq
    %v903 = vshrl.u32 %v902, 7
    %v904 = vsub.s32 %v819, %v903
    %v905 = vrot.slane %v685, %v904
    %v906 = vsel %vm824, %v905, %v901
    %v907 = vlaneseq
    %v908 = vshrl.u32 %v907, 7
    %v909 = vsub.s32 %v826, %v908
    %v910 = vrot.slane %v688, %v909
    %v911 = vsel %vm831, %v910, %v906
    %vm912 = vcmask 1041409
    %v913 = vsel %vm912, %v911, %v832
    %v915 = vsel %vm691, %v913, -1e+30
    %vm916 = vcmask 1041408
    %v917 = vsel %vm916, %v915, -inf
    %918 = vmax.xlane.f32.xlu0 %v917
    %v919 = vpop.xlane.xlu0 %918
    %v920 = vsub.f32 %v915, %v919
    %v921 = vmul.f32 %v920, 1.442695
    %v922 = vpow.pop %v921
    %v923 = vsel %vm916, %v922, 0.0
    %924 = vadd.xlane.f32.xlu0 %v923
    %v925 = vpop.xlane.xlu0 %924
    %v926 = vrcp.pop %v925
    %v927 = vmul.f32 %v922, %v926
    %928 = vst [vmem:[#allocation2] sm:$0x3] %v927
    // Predicated region
    $region22: #{tpu_custom_call.1} parent=1 // pred_check
      _
    $region23: #{tpu_custom_call.1} parent=1 // pred_check_branch
      %930 = sbr.rel (0) target = $region25
    $region24: #{tpu_custom_call.1} parent=1 // pred_region
      %s932 = ssub.s32 32, 32
      %933 = vsyncadd [#allocation3], %s932
      %s935 = sshll.u32 [#allocation2], 4
      %s936 = int_to_ptr.vmem [resolvable:$true] %s935
      %938 = dma.vmem_to_hbm [thread:$0]  %s936, 32, %s5, [#allocation3]
    $region25: #{tpu_custom_call.1} parent=1 // pred_fallthru
      _
    // Predicated region
    $region26: #{tpu_custom_call.1} parent=1 // pred_check
      _
    $region27: #{tpu_custom_call.1} parent=1 // pred_check_branch
      %940 = sbr.rel (0) target = $region29
    $region28: #{tpu_custom_call.1} parent=1 // pred_region
      %941 = dma.done [#allocation3], 32
    $region29: #{tpu_custom_call.1} parent=1 // pred_fallthru
      _
    %942 = vsyncpa [#allocation3], 1

</llo_original>
